<compile_context>
chip_gen: v5e
topology: v5e:2x2
jax: 0.10.0
libtpu: 0.0.40
codegen_flags: <defaults>
</compile_context>

<pallas_src>
import functools
import math

import jax
import jax.numpy as jnp
from jax import lax
from jax.experimental import pallas as pl
from jax.experimental.pallas import tpu as pltpu


def _pos_encoding_kernel(seed_ref, x_ref, pe_ref, o_ref, *, p: float):
    # x_ref : (ts, B, E)   pe_ref : (ts, E)   o_ref : (ts, B, E)
    x = x_ref[...]
    pe = pe_ref[...]
    y = x.astype(jnp.float32) + pe[:, None, :]          # broadcast over batch

    if p > 0.0:
        ts, B, E = y.shape
        # Global linear element index (counter) for this block.
        s_idx = lax.broadcasted_iota(jnp.int32, y.shape, 0)
        b_idx = lax.broadcasted_iota(jnp.int32, y.shape, 1)
        e_idx = lax.broadcasted_iota(jnp.int32, y.shape, 2)
        row0 = pl.program_id(0) * ts                      # per-tile offset
        lin = ((row0 + s_idx) * B + b_idx) * E + e_idx    # int32 (wrapping ok)

        # Mix in the runtime seed, then lowbias32 finalizer.
        h = lin.astype(jnp.uint32) ^ (
            seed_ref[0].astype(jnp.uint32) * jnp.uint32(0x9E3779B9))
        h = (h ^ (h >> 16)) * jnp.uint32(0x7FEB352D)
        h = (h ^ (h >> 15)) * jnp.uint32(0x846CA68B)
        h = h ^ (h >> 16)

        # Integer-threshold compare: P(keep) = 1 - p (exact to 1/2^32).
        thresh = jnp.uint32(min(int(round(p * 4294967296.0)), 4294967295))
        keep = h >= thresh
        y = jnp.where(keep, y, 0.0) * jnp.float32(1.0 / (1.0 - p))

    o_ref[...] = y.astype(o_ref.dtype)


def make_pos_embedding(emb_size: int, maxlen: int = 5000) -> jnp.ndarray:
    """Deterministic parameter setup, identical math to the torch __init__."""
    den = jnp.exp(-jnp.arange(0, emb_size, 2, dtype=jnp.float32)
                  * math.log(10000.0) / emb_size)
    pos = jnp.arange(0, maxlen, dtype=jnp.float32).reshape(maxlen, 1)
    pe = jnp.zeros((maxlen, emb_size), dtype=jnp.float32)
    pe = pe.at[:, 0::2].set(jnp.sin(pos * den))
    pe = pe.at[:, 1::2].set(jnp.cos(pos * den))
    return pe[:, None, :]                                 # (maxlen, 1, emb)


def _choose_seq_tile(S: int, B: int, E: int, itemsize: int,
                     target_bytes: int = 2 * 1024 * 1024) -> int:
    """Seq-tile so one (ts, B, E) block is ~target_bytes, sublane-friendly."""
    rows = max(1, target_bytes // max(1, B * E * itemsize))
    if rows >= S:
        return S
    rows = max(8, (rows // 8) * 8)    # multiple of 8 keeps the (ts, E) pe tile legal
    return min(rows, S)


def positional_encoding(token_embedding: jnp.ndarray,
                        pos_embedding: jnp.ndarray,
                        *,
                        dropout_p: float = 0.1,
                        seed: int = 0,
                        seq_tile: int | None = None) -> jnp.ndarray:
    """token_embedding: (S, B, E); pos_embedding: (maxlen, 1, E)."""
    assert 0.0 <= dropout_p < 1.0
    S, B, E = token_embedding.shape
    maxlen = pos_embedding.shape[0]
    assert S <= maxlen

    # Lane-dense 2-D view of the positional table (no size-1 sublane dim).
    pe2d = pos_embedding.reshape(maxlen, E)[:S]           # (S, E) -- glue slice

    itemsize = token_embedding.dtype.itemsize
    ts = seq_tile if seq_tile is not None else _choose_seq_tile(S, B, E, itemsize)
    grid = (pl.cdiv(S, ts),)

    seed_arr = jnp.asarray([seed], dtype=jnp.int32)
    kernel = functools.partial(_pos_encoding_kernel, p=float(dropout_p))

    return pl.pallas_call(
        kernel,
        out_shape=jax.ShapeDtypeStruct((S, B, E), token_embedding.dtype),
        grid_spec=pltpu.PrefetchScalarGridSpec(
            num_scalar_prefetch=1,
            grid=grid,
            in_specs=[
                pl.BlockSpec((ts, B, E), lambda i, _seed: (i, 0, 0)),
                pl.BlockSpec((ts, E), lambda i, _seed: (i, 0)),
            ],
            out_specs=pl.BlockSpec((ts, B, E), lambda i, _seed: (i, 0, 0)),
        ),
        compiler_params=pltpu.CompilerParams(
            dimension_semantics=("parallel",)),
    )(seed_arr, token_embedding, pe2d)


if __name__ == "__main__":
    SEQ, BATCH, EMB = 8, 2, 32
    MAXLEN = 5000
    DROPOUT_P = 0.1

    key = jax.random.PRNGKey(0)
    token_embedding = jax.random.normal(key, (SEQ, BATCH, EMB),
                                        dtype=jnp.float32)
    pos_embedding = make_pos_embedding(EMB, MAXLEN)
    ref = token_embedding + pos_embedding[:SEQ]

    # Deterministic (eval / p=0) path.
    out_eval = jax.block_until_ready(
        positional_encoding(token_embedding, pos_embedding, dropout_p=0.0))
    assert out_eval.shape == (SEQ, BATCH, EMB)
    assert jnp.allclose(out_eval, ref, atol=1e-6, rtol=1e-6)

    # Training-mode forward with in-kernel dropout: kept entries must equal the
    # reference scaled by 1/(1-p); dropped entries are exactly zero.
    out_train = jax.block_until_ready(
        positional_encoding(token_embedding, pos_embedding,
                            dropout_p=DROPOUT_P, seed=0))
    assert out_train.shape == (SEQ, BATCH, EMB)
    keep = out_train != 0.0
    scaled = ref / (1.0 - DROPOUT_P)
    assert jnp.allclose(jnp.where(keep, out_train, 0.0),
                        jnp.where(keep, scaled, 0.0),
                        atol=1e-5, rtol=1e-5)

    # Multi-tile path: larger lane-aligned shape, forced small seq tile so the
    # grid has several blocks (exercises pipelining + parallel semantics).
    S2, B2, E2 = 256, 4, 128
    x2 = jax.random.normal(jax.random.PRNGKey(1), (S2, B2, E2),
                           dtype=jnp.float32)
    pe2 = make_pos_embedding(E2, MAXLEN)
    out2 = jax.block_until_ready(
        positional_encoding(x2, pe2, dropout_p=0.0, seq_tile=64))
    assert jnp.allclose(out2, x2 + pe2[:S2], atol=1e-6, rtol=1e-6)

    print("KERNEL_OK")
</pallas_src>

<mosaic_0001>
module attributes {stable_mosaic.version = 11 : i64} {
  func.func @_pos_encoding_kernel(%arg0: i32, %arg1: memref<1xi32, #tpu.memory_space<smem>>, %arg2: memref<8x2x32xf32, #tpu.memory_space<vmem>>, %arg3: memref<8x32xf32, #tpu.memory_space<vmem>>, %arg4: memref<8x2x32xf32, #tpu.memory_space<vmem>>) attributes {dimension_semantics = [#tpu.dimension_semantics<parallel>], iteration_bounds = array<i64: 1>, scalar_prefetch = 1 : i64, scratch_operands = 0 : i64, tpu.core_type = #tpu.core_type<tc>, window_params = [{transform_indices = @transform_0, window_bounds = array<i64: 8, 2, 32>}, {transform_indices = @transform_1, window_bounds = array<i64: 8, 32>}, {transform_indices = @transform_2, window_bounds = array<i64: 8, 2, 32>}]} {
    %c0 = arith.constant 0 : index
    %c0_0 = arith.constant 0 : index
    %c0_1 = arith.constant 0 : index
    %0 = vector.load %arg2[%c0, %c0_0, %c0_1] : memref<8x2x32xf32, #tpu.memory_space<vmem>>, vector<8x2x32xf32>
    %c0_2 = arith.constant 0 : index
    %c0_3 = arith.constant 0 : index
    %1 = vector.load %arg3[%c0_2, %c0_3] : memref<8x32xf32, #tpu.memory_space<vmem>>, vector<8x32xf32>
    %2 = vector.shape_cast %1 : vector<8x32xf32> to vector<8x1x32xf32>
    %3 = vector.broadcast %2 : vector<8x1x32xf32> to vector<8x2x32xf32>
    %4 = arith.addf %0, %3 : vector<8x2x32xf32>
    %c0_4 = arith.constant 0 : index
    %c0_5 = arith.constant 0 : index
    %c0_6 = arith.constant 0 : index
    %5 = vector.load %arg4[%c0_4, %c0_5, %c0_6] : memref<8x2x32xf32, #tpu.memory_space<vmem>>, vector<8x2x32xf32>
    tpu.vector_store %arg4[%c0_4, %c0_5, %c0_6], %4 {strides = array<i32>} : memref<8x2x32xf32, #tpu.memory_space<vmem>>, vector<8x2x32xf32>,
    return
  }
  func.func @transform_0(%arg0: i32, %arg1: memref<1xi32, #tpu.memory_space<smem>>) -> (i32, i32, i32) {
    %c0_i32 = arith.constant 0 : i32
    %c0_i32_0 = arith.constant 0 : i32
    %c0_i32_1 = arith.constant 0 : i32
    return %arg0, %c0_i32, %c0_i32_0 : i32, i32, i32
  }
  func.func @transform_1(%arg0: i32, %arg1: memref<1xi32, #tpu.memory_space<smem>>) -> (i32, i32) {
    %c0_i32 = arith.constant 0 : i32
    %c0_i32_0 = arith.constant 0 : i32
    return %arg0, %c0_i32 : i32, i32
  }
  func.func @transform_2(%arg0: i32, %arg1: memref<1xi32, #tpu.memory_space<smem>>) -> (i32, i32, i32) {
    %c0_i32 = arith.constant 0 : i32
    %c0_i32_0 = arith.constant 0 : i32
    %c0_i32_1 = arith.constant 0 : i32
    return %arg0, %c0_i32, %c0_i32_0 : i32, i32, i32
  }
}

</mosaic_0001>

<llo_original>
// kernel: tpu_custom_call.1
$region0: #{tpu_custom_call.1}
  #allocation0 [shape = 'u32[]', space=smem, size = 0x4, offset = 0x4, fixed_abs, tag = 'smem constant byte address 0x4 - core index']
  #allocation1 [shape = 'u32[72,128]{1,0:T(1,128)}', space=vmem, size = 0x9000, scoped, tag = 'internal scratch']
  #allocation2 [shape = 's32[1]{0}', space=sflag, size = 0x4, scoped, tag = 'scoped memory for tpu_custom_call.1']
  #allocation3 [shape = 's32[1]{0:T(128)S(6)}', space=smem, size = 0x200, scoped, tag = 'prefetched SMEM operand 0']
  %s0 = inlined_call_operand.<no memory space> [shape: s32[1], index: 0, kind: input, shape index: {}]
  %s1 = inlined_call_operand.hbm [shape: f32[8,2,32], index: 1, kind: input, shape index: {}]
  %s2 = inlined_call_operand.hbm [shape: f32[8,32], index: 2, kind: input, shape index: {}]
  %s3 = inlined_call_operand.hbm [shape: f32[8,2,32], index: 3, kind: output, shape index: {}]
  %s4 = sld [smem:[#allocation0]]
  $region26: #{tpu_custom_call.1} parent=0
    _
  %s6 = ssub.s32 1, %s4
  %s7 = scalar_select 0, %s6, %s4
  %8 = sst [smem:[#allocation3]] %s0
  $region1: #{tpu_custom_call.1} parent=0
    #allocation4 [shape = 'u8[8192]{0}', space=vmem, size = 0x2000, scoped, tag = 'input window, operand 1, single buffered']
    #allocation5 [shape = 's32[1]{0}', space=sflag, size = 0x4, scoped, tag = 'scoped memory for tpu_custom_call.1']
    #allocation6 [shape = 's32[1]{0}', space=sflag, size = 0x4, scoped, tag = 'scoped memory for tpu_custom_call.1']
    #allocation7 [shape = 'u8[4096]{0}', space=vmem, size = 0x1000, scoped, tag = 'input window, operand 2, single buffered']
    #allocation8 [shape = 's32[1]{0}', space=sflag, size = 0x4, scoped, tag = 'scoped memory for tpu_custom_call.1']
    #allocation9 [shape = 'u8[8192]{0}', space=vmem, size = 0x2000, scoped, tag = 'output window, operand 0, single buffered']
    %9 = vsyncpa [#allocation5], 0
    %10 = vsyncpa [#allocation8], 0
    %11 = vsyncpa [#allocation6], 0
    // Predicated region
    $region2: #{tpu_custom_call.1} parent=1 // pred_check
      _
    $region3: #{tpu_custom_call.1} parent=1 // pred_check_branch
      %13 = sbr.rel (0) target = $region5
    $region4: #{tpu_custom_call.1} parent=1 // pred_region
      %15 = vsyncadd [#allocation5], 0
      %s16 = sshll.u32 %s1, 4
      %s17 = int_to_ptr.hbm [resolvable:$true] %s16
      %s18 = sshll.u32 [#allocation4], 4
      %s19 = int_to_ptr.vmem [resolvable:$true] %s18
      %24 = dma.hbm_to_vmem [thread:$0]  %s17, 256, %s19, [#allocation5], 32, 32, 2
    $region5: #{tpu_custom_call.1} parent=1 // pred_fallthru
      _
    // Predicated region
    $region6: #{tpu_custom_call.1} parent=1 // pred_check
      _
    $region7: #{tpu_custom_call.1} parent=1 // pred_check_branch
      %26 = sbr.rel (0) target = $region9
    $region8: #{tpu_custom_call.1} parent=1 // pred_region
      %28 = vsyncadd [#allocation8], 0
      %s30 = sshll.u32 %s2, 4
      %s31 = int_to_ptr.hbm [resolvable:$true] %s30
      %s32 = sshll.u32 [#allocation7], 4
      %s33 = int_to_ptr.vmem [resolvable:$true] %s32
      %35 = dma.hbm_to_vmem [thread:$0]  %s31, 128, %s33, [#allocation8]
    $region9: #{tpu_custom_call.1} parent=1 // pred_fallthru
      _
    // Predicated region
    $region10: #{tpu_custom_call.1} parent=1 // pred_check
      _
    $region11: #{tpu_custom_call.1} parent=1 // pred_check_branch
      %37 = sbr.rel (0) target = $region13
    $region12: #{tpu_custom_call.1} parent=1 // pred_region
      %39 = dma.done [#allocation5], 256
    $region13: #{tpu_custom_call.1} parent=1 // pred_fallthru
      _
    // Predicated region
    $region14: #{tpu_custom_call.1} parent=1 // pred_check
      _
    $region15: #{tpu_custom_call.1} parent=1 // pred_check_branch
      %41 = sbr.rel (0) target = $region17
    $region16: #{tpu_custom_call.1} parent=1 // pred_region
      %43 = dma.done [#allocation8], 128
    $region17: #{tpu_custom_call.1} parent=1 // pred_fallthru
      _
    %v44 = vld [vmem:[#allocation4] sm:$0x3]
    %v45 = vld [vmem:[#allocation4 + $0x2] sm:$0x3]
    %v46 = vld [vmem:[#allocation4 + $0x4] sm:$0x3]
    %v47 = vld [vmem:[#allocation4 + $0x6] sm:$0x3]
    %v48 = vld [vmem:[#allocation4 + $0x8] sm:$0x3]
    %v49 = vld [vmem:[#allocation4 + $0xa] sm:$0x3]
    %v50 = vld [vmem:[#allocation4 + $0xc] sm:$0x3]
    %v51 = vld [vmem:[#allocation4 + $0xe] sm:$0x3]
    %v52 = vld [vmem:[#allocation7] sm:$0xff]
    %v54 = vrot.slane %v52, 1
    %v55 = vrot.slane %v52, 2
    %v56 = vrot.slane %v52, 3
    %v57 = vrot.slane %v52, 4
    %v58 = vrot.slane %v52, 5
    %v59 = vrot.slane %v52, 6
    %v60 = vrot.slane %v52, 7
    %v61 = vperm.slane %v52, 0
    %v62 = vperm.slane %v54, 0
    %v63 = vperm.slane %v55, 0
    %v64 = vperm.slane %v56, 0
    %v65 = vperm.slane %v57, 0
    %v66 = vperm.slane %v58, 0
    %v67 = vperm.slane %v59, 0
    %v68 = vperm.slane %v60, 0
    %v77 = vadd.f32 %v44, %v61
    %v78 = vadd.f32 %v45, %v62
    %v79 = vadd.f32 %v46, %v63
    %v80 = vadd.f32 %v47, %v64
    %v81 = vadd.f32 %v48, %v65
    %v82 = vadd.f32 %v49, %v66
    %v83 = vadd.f32 %v50, %v67
    %v84 = vadd.f32 %v51, %v68
    %vm85 = vcmask 254976
    %86 = vst.msk [vmem:[#allocation9] sm:$0x3] %vm85, %v77
    %87 = vst.msk [vmem:[#allocation9 + $0x2] sm:$0x3] %vm85, %v78
    %88 = vst.msk [vmem:[#allocation9 + $0x4] sm:$0x3] %vm85, %v79
    %89 = vst.msk [vmem:[#allocation9 + $0x6] sm:$0x3] %vm85, %v80
    %90 = vst.msk [vmem:[#allocation9 + $0x8] sm:$0x3] %vm85, %v81
    %91 = vst.msk [vmem:[#allocation9 + $0xa] sm:$0x3] %vm85, %v82
    %92 = vst.msk [vmem:[#allocation9 + $0xc] sm:$0x3] %vm85, %v83
    %93 = vst.msk [vmem:[#allocation9 + $0xe] sm:$0x3] %vm85, %v84
    // Predicated region
    $region18: #{tpu_custom_call.1} parent=1 // pred_check
      _
    $region19: #{tpu_custom_call.1} parent=1 // pred_check_branch
      %95 = sbr.rel (0) target = $region21
    $region20: #{tpu_custom_call.1} parent=1 // pred_region
      %97 = vsyncadd [#allocation6], 0
      %s98 = sshll.u32 [#allocation9], 4
      %s99 = int_to_ptr.vmem [resolvable:$true] %s98
      %s100 = sshll.u32 %s3, 4
      %s101 = int_to_ptr.hbm [resolvable:$true] %s100
      %106 = dma.vmem_to_hbm [thread:$0]  %s99, 256, %s101, [#allocation6], 32, 32, 2
    $region21: #{tpu_custom_call.1} parent=1 // pred_fallthru
      _
    // Predicated region
    $region22: #{tpu_custom_call.1} parent=1 // pred_check
      _
    $region23: #{tpu_custom_call.1} parent=1 // pred_check_branch
      %108 = sbr.rel (0) target = $region25
    $region24: #{tpu_custom_call.1} parent=1 // pred_region
      %110 = dma.done [#allocation6], 256
    $region25: #{tpu_custom_call.1} parent=1 // pred_fallthru
      _
    %111 = vsyncpa [#allocation5], 1
    %112 = vsyncpa [#allocation8], 1
    %113 = vsyncpa [#allocation6], 1

</llo_original>
